<compile_context>
chip_gen: v7x
topology: tpu7x:2x2x1
jax: 0.10.0
libtpu: 0.0.40
codegen_flags: <defaults>
</compile_context>

<pallas_src>
import functools

import jax
import jax.numpy as jnp
from jax.experimental import pallas as pl
from jax.experimental.pallas import tpu as pltpu


def resblock_kernel(x_ref, w1_ref, b1_ref, w2_ref, b2_ref, o_ref, *, seq_len):
    # x_ref/o_ref: (N*L, C); w*_ref: (3*C, C) tap-major im2col weights; b*_ref: (1, C)
    x = x_ref[...]
    nl, c = x.shape

    # Per-sequence position masks (rows are [batch0: 0..L-1, batch1: 0..L-1, ...]).
    row = jax.lax.broadcasted_iota(jnp.int32, (nl, c), 0)
    pos = row % seq_len
    is_first = pos == 0
    is_last = pos == (seq_len - 1)

    def im2col(h):
        # [h[l-1], h[l], h[l+1]] with zero padding at each sequence boundary.
        # Roll rides the XLU; the wrap-around rows (and batch-boundary rows)
        # are exactly the masked padding rows.
        h_prev = jnp.where(is_first, 0.0, pltpu.roll(h, shift=1, axis=0))
        h_next = jnp.where(is_last, 0.0, pltpu.roll(h, shift=nl - 1, axis=0))
        return jnp.concatenate([h_prev, h, h_next], axis=1)          # (N*L, 3C)

    # --- ReLU -> Conv1d #1 (single MXU matmul, K = 3C) ---
    col1 = im2col(jnp.maximum(x, 0.0))
    y1 = jnp.dot(col1, w1_ref[...], preferred_element_type=jnp.float32) + b1_ref[...]

    # --- ReLU -> Conv1d #2 ---
    col2 = im2col(jnp.maximum(y1, 0.0))
    y2 = jnp.dot(col2, w2_ref[...], preferred_element_type=jnp.float32) + b2_ref[...]

    # --- residual: input + 0.3 * output ---
    # NOTE: output lane dim is C=32 (<128) -> masked stores; an in-kernel
    # (N*L, C) -> (8, 128) reshape would make stores lane-dense, but the
    # relayout costs more XLU work than the few masked vst it saves at 4 KB.
    o_ref[...] = (x + 0.3 * y2).astype(o_ref.dtype)


def resblock_pallas_nlc(x_nlc, w1, b1, w2, b2):
    """Core entry point, channels-last activations.

    x_nlc: (N, L, C) float32; w1, w2: (C_out, C_in, 3) PyTorch Conv1d weights;
    b1, b2: (C,).
    """
    N, L, C = x_nlc.shape
    x2d = x_nlc.reshape(N * L, C)                     # contiguous, free reshape

    # PyTorch (C_out, C_in, K) -> im2col weight (K*C_in, C_out), tap-major rows.
    w1_f = jnp.transpose(w1, (2, 1, 0)).reshape(3 * C, C)
    w2_f = jnp.transpose(w2, (2, 1, 0)).reshape(3 * C, C)
    b1_r = b1.reshape(1, C)
    b2_r = b2.reshape(1, C)

    out2d = pl.pallas_call(
        functools.partial(resblock_kernel, seq_len=L),
        out_shape=jax.ShapeDtypeStruct((N * L, C), x_nlc.dtype),
        grid_spec=pltpu.PrefetchScalarGridSpec(
            num_scalar_prefetch=0,
            grid=(1,),                                   # whole problem in one step
            in_specs=[
                pl.BlockSpec((N * L, C), lambda i: (0, 0)),   # x (full batch)
                pl.BlockSpec((3 * C, C), lambda i: (0, 0)),   # w1 (grid-invariant)
                pl.BlockSpec((1, C),     lambda i: (0, 0)),   # b1
                pl.BlockSpec((3 * C, C), lambda i: (0, 0)),   # w2
                pl.BlockSpec((1, C),     lambda i: (0, 0)),   # b2
            ],
            out_specs=pl.BlockSpec((N * L, C), lambda i: (0, 0)),
        ),
        compiler_params=pltpu.CompilerParams(
            dimension_semantics=("arbitrary",)),
    )(x2d, w1_f, b1_r, w2_f, b2_r)

    return out2d.reshape(N, L, C)


def resblock_pallas(x_ncl, w1, b1, w2, b2):
    """PyTorch-layout entry point: x_ncl is (N, C, L) as nn.Conv1d expects.

    The two transposes below are separate XLA HBM passes; if the surrounding
    model keeps activations channels-last, call resblock_pallas_nlc directly
    and skip them entirely.
    """
    out_nlc = resblock_pallas_nlc(jnp.transpose(x_ncl, (0, 2, 1)), w1, b1, w2, b2)
    return jnp.transpose(out_nlc, (0, 2, 1))


def resblock_reference(x_ncl, w1, b1, w2, b2):
    """Pure-JAX reference using lax.conv_general_dilated (matches PyTorch Conv1d)."""
    def conv1d(x, w, b):
        y = jax.lax.conv_general_dilated(
            x, w, window_strides=(1,), padding=((1, 1),),
            dimension_numbers=("NCH", "OIH", "NCH"))
        return y + b[None, :, None]

    h = conv1d(jnp.maximum(x_ncl, 0.0), w1, b1)
    h = conv1d(jnp.maximum(h, 0.0), w2, b2)
    return x_ncl + 0.3 * h


if __name__ == "__main__":
    N, C, L = 2, 32, 16          # batch=2, hidden=32, seq_len=16
    key = jax.random.PRNGKey(0)
    kx, k1, k2, k3, k4 = jax.random.split(key, 5)

    x = jax.random.normal(kx, (N, C, L), dtype=jnp.float32)
    # Synthetic nn.Conv1d(C, C, kernel_size=3, padding=1) parameters.
    w1 = jax.random.normal(k1, (C, C, 3), dtype=jnp.float32) * 0.1
    b1 = jax.random.normal(k2, (C,), dtype=jnp.float32) * 0.1
    w2 = jax.random.normal(k3, (C, C, 3), dtype=jnp.float32) * 0.1
    b2 = jax.random.normal(k4, (C,), dtype=jnp.float32) * 0.1

    out = jax.block_until_ready(resblock_pallas(x, w1, b1, w2, b2))
    ref = jax.block_until_ready(resblock_reference(x, w1, b1, w2, b2))

    assert out.shape == (N, C, L)
    assert jnp.allclose(out, ref, atol=1e-5, rtol=1e-5)
    print("KERNEL_OK")
</pallas_src>

<mosaic_0001>
module attributes {stable_mosaic.version = 11 : i64} {
  func.func @resblock_kernel(%arg0: i32, %arg1: memref<32x32xf32, #tpu.memory_space<vmem>>, %arg2: memref<96x32xf32, #tpu.memory_space<vmem>>, %arg3: memref<1x32xf32, #tpu.memory_space<vmem>>, %arg4: memref<96x32xf32, #tpu.memory_space<vmem>>, %arg5: memref<1x32xf32, #tpu.memory_space<vmem>>, %arg6: memref<32x32xf32, #tpu.memory_space<vmem>>) attributes {dimension_semantics = [#tpu.dimension_semantics<arbitrary>], iteration_bounds = array<i64: 1>, scalar_prefetch = 0 : i64, scratch_operands = 0 : i64, tpu.core_type = #tpu.core_type<tc>, window_params = [{pipeline_mode = #tpu.pipeline_mode<synchronous>, transform_indices = @transform_0, window_bounds = array<i64: 32, 32>}, {pipeline_mode = #tpu.pipeline_mode<synchronous>, transform_indices = @transform_1, window_bounds = array<i64: 96, 32>}, {pipeline_mode = #tpu.pipeline_mode<synchronous>, transform_indices = @transform_2, window_bounds = array<i64: 1, 32>}, {pipeline_mode = #tpu.pipeline_mode<synchronous>, transform_indices = @transform_3, window_bounds = array<i64: 96, 32>}, {pipeline_mode = #tpu.pipeline_mode<synchronous>, transform_indices = @transform_4, window_bounds = array<i64: 1, 32>}, {pipeline_mode = #tpu.pipeline_mode<synchronous>, transform_indices = @transform_5, window_bounds = array<i64: 32, 32>}]} {
    %c0 = arith.constant 0 : index
    %c0_0 = arith.constant 0 : index
    %0 = vector.load %arg1[%c0, %c0_0] : memref<32x32xf32, #tpu.memory_space<vmem>>, vector<32x32xf32>
    %1 = tpu.iota {dimensions = array<i32: 0>} : vector<32x32xi32>
    %c16_i32 = arith.constant 16 : i32
    %c0_i32 = arith.constant 0 : i32
    %2 = arith.cmpi eq, %c16_i32, %c0_i32 : i32
    %c1_i32 = arith.constant 1 : i32
    %3 = arith.select %2, %c1_i32, %c16_i32 : i32
    %4 = vector.broadcast %3 : i32 to vector<32x32xi32>
    %5 = arith.remsi %1, %4 : vector<32x32xi32>
    %c0_i32_1 = arith.constant 0 : i32
    %6 = vector.broadcast %c0_i32_1 : i32 to vector<32x32xi32>
    %7 = arith.cmpi ne, %5, %6 : vector<32x32xi32>
    %c0_i32_2 = arith.constant 0 : i32
    %8 = vector.broadcast %c0_i32_2 : i32 to vector<32x32xi32>
    %9 = arith.cmpi slt, %5, %8 : vector<32x32xi32>
    %c0_i32_3 = arith.constant 0 : i32
    %10 = arith.cmpi slt, %3, %c0_i32_3 : i32
    %11 = vector.broadcast %10 : i1 to vector<32x32xi1>
    %12 = vector.broadcast %11 : vector<32x32xi1> to vector<32x32xi1>
    %13 = arith.xori %9, %12 : vector<32x32xi1>
    %14 = arith.andi %13, %7 : vector<32x32xi1>
    %15 = vector.broadcast %3 : i32 to vector<32x32xi32>
    %16 = arith.addi %5, %15 : vector<32x32xi32>
    %17 = arith.select %14, %16, %5 : vector<32x32xi1>, vector<32x32xi32>
    %c0_i32_4 = arith.constant 0 : i32
    %18 = vector.broadcast %c0_i32_4 : i32 to vector<32x32xi32>
    %19 = arith.cmpi eq, %17, %18 : vector<32x32xi32>
    %c15_i32 = arith.constant 15 : i32
    %20 = vector.broadcast %c15_i32 : i32 to vector<32x32xi32>
    %21 = arith.cmpi eq, %17, %20 : vector<32x32xi32>
    %cst = arith.constant 0.000000e+00 : f32
    %22 = vector.broadcast %cst : f32 to vector<32x32xf32>
    %23 = arith.maximumf %0, %22 : vector<32x32xf32>
    %c1_i32_5 = arith.constant 1 : i32
    %24 = tpu.dynamic_rotate %23 by %c1_i32_5 dim 0 : vector<32x32xf32>, i32 -> vector<32x32xf32>
    %cst_6 = arith.constant 0.000000e+00 : f32
    %25 = vector.broadcast %cst_6 : f32 to vector<32x32xf32>
    %26 = arith.select %19, %25, %24 : vector<32x32xi1>, vector<32x32xf32>
    %c31_i32 = arith.constant 31 : i32
    %27 = tpu.dynamic_rotate %23 by %c31_i32 dim 0 : vector<32x32xf32>, i32 -> vector<32x32xf32>
    %cst_7 = arith.constant 0.000000e+00 : f32
    %28 = vector.broadcast %cst_7 : f32 to vector<32x32xf32>
    %29 = arith.select %21, %28, %27 : vector<32x32xi1>, vector<32x32xf32>
    %30 = tpu.concatenate %26, %23, %29 in 1 : vector<32x32xf32>, vector<32x32xf32>, vector<32x32xf32> -> vector<32x96xf32>
    %c0_8 = arith.constant 0 : index
    %c0_9 = arith.constant 0 : index
    %31 = vector.load %arg2[%c0_8, %c0_9] : memref<96x32xf32, #tpu.memory_space<vmem>>, vector<96x32xf32>
    %cst_10 = arith.constant dense<0.000000e+00> : vector<32x32xf32>
    %32 = tpu.matmul %30, %31, %cst_10 {dimension_numbers = #tpu.dot_dimension_numbers<[1], [0], [0], [1], [0, 0, 1, 1], [], []>} : vector<32x96xf32>, vector<96x32xf32>, vector<32x32xf32> -> vector<32x32xf32>
    %c0_11 = arith.constant 0 : index
    %c0_12 = arith.constant 0 : index
    %33 = vector.load %arg3[%c0_11, %c0_12] : memref<1x32xf32, #tpu.memory_space<vmem>>, vector<1x32xf32>
    %34 = vector.broadcast %33 : vector<1x32xf32> to vector<32x32xf32>
    %35 = arith.addf %32, %34 : vector<32x32xf32>
    %cst_13 = arith.constant 0.000000e+00 : f32
    %36 = vector.broadcast %cst_13 : f32 to vector<32x32xf32>
    %37 = arith.maximumf %35, %36 : vector<32x32xf32>
    %c1_i32_14 = arith.constant 1 : i32
    %38 = tpu.dynamic_rotate %37 by %c1_i32_14 dim 0 : vector<32x32xf32>, i32 -> vector<32x32xf32>
    %cst_15 = arith.constant 0.000000e+00 : f32
    %39 = vector.broadcast %cst_15 : f32 to vector<32x32xf32>
    %40 = arith.select %19, %39, %38 : vector<32x32xi1>, vector<32x32xf32>
    %c31_i32_16 = arith.constant 31 : i32
    %41 = tpu.dynamic_rotate %37 by %c31_i32_16 dim 0 : vector<32x32xf32>, i32 -> vector<32x32xf32>
    %cst_17 = arith.constant 0.000000e+00 : f32
    %42 = vector.broadcast %cst_17 : f32 to vector<32x32xf32>
    %43 = arith.select %21, %42, %41 : vector<32x32xi1>, vector<32x32xf32>
    %44 = tpu.concatenate %40, %37, %43 in 1 : vector<32x32xf32>, vector<32x32xf32>, vector<32x32xf32> -> vector<32x96xf32>
    %c0_18 = arith.constant 0 : index
    %c0_19 = arith.constant 0 : index
    %45 = vector.load %arg4[%c0_18, %c0_19] : memref<96x32xf32, #tpu.memory_space<vmem>>, vector<96x32xf32>
    %cst_20 = arith.constant dense<0.000000e+00> : vector<32x32xf32>
    %46 = tpu.matmul %44, %45, %cst_20 {dimension_numbers = #tpu.dot_dimension_numbers<[1], [0], [0], [1], [0, 0, 1, 1], [], []>} : vector<32x96xf32>, vector<96x32xf32>, vector<32x32xf32> -> vector<32x32xf32>
    %c0_21 = arith.constant 0 : index
    %c0_22 = arith.constant 0 : index
    %47 = vector.load %arg5[%c0_21, %c0_22] : memref<1x32xf32, #tpu.memory_space<vmem>>, vector<1x32xf32>
    %48 = vector.broadcast %47 : vector<1x32xf32> to vector<32x32xf32>
    %49 = arith.addf %46, %48 : vector<32x32xf32>
    %cst_23 = arith.constant 3.000000e-01 : f32
    %50 = vector.broadcast %cst_23 : f32 to vector<32x32xf32>
    %51 = arith.mulf %50, %49 : vector<32x32xf32>
    %52 = arith.addf %0, %51 : vector<32x32xf32>
    %c0_24 = arith.constant 0 : index
    %c0_25 = arith.constant 0 : index
    %53 = vector.load %arg6[%c0_24, %c0_25] : memref<32x32xf32, #tpu.memory_space<vmem>>, vector<32x32xf32>
    tpu.vector_store %arg6[%c0_24, %c0_25], %52 {strides = array<i32>} : memref<32x32xf32, #tpu.memory_space<vmem>>, vector<32x32xf32>,
    return
  }
  func.func @transform_0(%arg0: i32) -> (i32, i32) {
    %c0_i32 = arith.constant 0 : i32
    %c0_i32_0 = arith.constant 0 : i32
    %c0_i32_1 = arith.constant 0 : i32
    return %c0_i32, %c0_i32_0 : i32, i32
  }
  func.func @transform_1(%arg0: i32) -> (i32, i32) {
    %c0_i32 = arith.constant 0 : i32
    %c0_i32_0 = arith.constant 0 : i32
    %c0_i32_1 = arith.constant 0 : i32
    return %c0_i32, %c0_i32_0 : i32, i32
  }
  func.func @transform_2(%arg0: i32) -> (i32, i32) {
    %c0_i32 = arith.constant 0 : i32
    %c0_i32_0 = arith.constant 0 : i32
    %c0_i32_1 = arith.constant 0 : i32
    return %c0_i32, %c0_i32_0 : i32, i32
  }
  func.func @transform_3(%arg0: i32) -> (i32, i32) {
    %c0_i32 = arith.constant 0 : i32
    %c0_i32_0 = arith.constant 0 : i32
    %c0_i32_1 = arith.constant 0 : i32
    return %c0_i32, %c0_i32_0 : i32, i32
  }
  func.func @transform_4(%arg0: i32) -> (i32, i32) {
    %c0_i32 = arith.constant 0 : i32
    %c0_i32_0 = arith.constant 0 : i32
    %c0_i32_1 = arith.constant 0 : i32
    return %c0_i32, %c0_i32_0 : i32, i32
  }
  func.func @transform_5(%arg0: i32) -> (i32, i32) {
    %c0_i32 = arith.constant 0 : i32
    %c0_i32_0 = arith.constant 0 : i32
    %c0_i32_1 = arith.constant 0 : i32
    return %c0_i32, %c0_i32_0 : i32, i32
  }
}

</mosaic_0001>

<llo_original>
// kernel: tpu_custom_call.1
$region0: #{tpu_custom_call.1}
  #allocation0 [shape = 'u32[]', space=smem, size = 0x4, offset = 0x4, fixed_abs, tag = 'smem constant byte address 0x4 - core index']
  #allocation1 [shape = 'u32[144,128]{1,0:T(1,128)}', space=vmem, size = 0x12000, scoped, tag = 'internal scratch']
  %s0 = inlined_call_operand.vmem [shape: f32[32,32], index: 0, kind: input, shape index: {}]
  %s1 = inlined_call_operand.vmem [shape: f32[96,32], index: 1, kind: input, shape index: {}]
  %s2 = inlined_call_operand.vmem [shape: f32[1,32], index: 2, kind: input, shape index: {}]
  %s3 = inlined_call_operand.vmem [shape: f32[96,32], index: 3, kind: input, shape index: {}]
  %s4 = inlined_call_operand.vmem [shape: f32[1,32], index: 4, kind: input, shape index: {}]
  %s5 = inlined_call_operand.hbm [shape: f32[32,32], index: 5, kind: output, shape index: {}]
  %s6 = sld [smem:[#allocation0]]
  $region30: #{tpu_custom_call.1} parent=0
    _
  %s8 = ssub.s32 1, %s6
  %s9 = scalar_select 0, %s8, %s6
  $region1: #{tpu_custom_call.1} parent=0
    #allocation2 [shape = 'u8[16384]{0}', space=vmem, size = 0x4000, scoped, tag = 'output window, operand 0, single buffered']
    #allocation3 [shape = 's32[1]{0}', space=sflag, size = 0x4, scoped, tag = 'scoped memory for tpu_custom_call.1']
    %10 = vsyncpa [#allocation3], 0
    // Predicated region
    $region2: #{tpu_custom_call.1} parent=1 // pred_check
      _
    $region3: #{tpu_custom_call.1} parent=1 // pred_check_branch
      %12 = sbr.rel (0) target = $region5
    $region4: #{tpu_custom_call.1} parent=1 // pred_region
      _
    $region5: #{tpu_custom_call.1} parent=1 // pred_fallthru
      _
    // Predicated region
    $region6: #{tpu_custom_call.1} parent=1 // pred_check
      _
    $region7: #{tpu_custom_call.1} parent=1 // pred_check_branch
      %14 = sbr.rel (0) target = $region9
    $region8: #{tpu_custom_call.1} parent=1 // pred_region
      _
    $region9: #{tpu_custom_call.1} parent=1 // pred_fallthru
      _
    // Predicated region
    $region10: #{tpu_custom_call.1} parent=1 // pred_check
      _
    $region11: #{tpu_custom_call.1} parent=1 // pred_check_branch
      %16 = sbr.rel (0) target = $region13
    $region12: #{tpu_custom_call.1} parent=1 // pred_region
      _
    $region13: #{tpu_custom_call.1} parent=1 // pred_fallthru
      _
    // Predicated region
    $region14: #{tpu_custom_call.1} parent=1 // pred_check
      _
    $region15: #{tpu_custom_call.1} parent=1 // pred_check_branch
      %18 = sbr.rel (0) target = $region17
    $region16: #{tpu_custom_call.1} parent=1 // pred_region
      _
    $region17: #{tpu_custom_call.1} parent=1 // pred_fallthru
      _
    // Predicated region
    $region18: #{tpu_custom_call.1} parent=1 // pred_check
      _
    $region19: #{tpu_custom_call.1} parent=1 // pred_check_branch
      %20 = sbr.rel (0) target = $region21
    $region20: #{tpu_custom_call.1} parent=1 // pred_region
      _
    $region21: #{tpu_custom_call.1} parent=1 // pred_fallthru
      _
    %v21 = vld [vmem:[%s0] sm:$0xff]
    %v22 = vld [vmem:[%s0 + $0x8] sm:$0xff]
    %v23 = vld [vmem:[%s0 + $0x10] sm:$0xff]
    %v24 = vld [vmem:[%s0 + $0x18] sm:$0xff]
    %v25 = vlaneseq
    %v26 = vshrl.u32 %v25, 7
    %v27 = vadd.s32 %v26, 8
    %v28 = vadd.s32 %v26, 16
    %v29 = vadd.s32 %v26, 24
    %vm30 = vcmp.lt.s32.totalorder %v26, 0
    %v31 = vsub.s32 0, %v26
    %v32 = vsel %vm30, %v31, %v26
    %v33 = vshrl.u32 %v32, 4
    %v34 = vand.u32 %v32, 15
    %v35 = vsub.s32 0, %v34
    %v36 = vsel %vm30, %v35, %v34
    %vm37 = vcmp.lt.s32.totalorder %v27, 0
    %v38 = vsub.s32 0, %v27
    %v39 = vsel %vm37, %v38, %v27
    %v40 = vshrl.u32 %v39, 4
    %v41 = vand.u32 %v39, 15
    %v42 = vsub.s32 0, %v41
    %v43 = vsel %vm37, %v42, %v41
    %vm44 = vcmp.lt.s32.totalorder %v28, 0
    %v45 = vsub.s32 0, %v28
    %v46 = vsel %vm44, %v45, %v28
    %v47 = vshrl.u32 %v46, 4
    %v48 = vand.u32 %v46, 15
    %v49 = vsub.s32 0, %v48
    %v50 = vsel %vm44, %v49, %v48
    %vm51 = vcmp.lt.s32.totalorder %v29, 0
    %v52 = vsub.s32 0, %v29
    %v53 = vsel %vm51, %v52, %v29
    %v54 = vshrl.u32 %v53, 4
    %v55 = vand.u32 %v53, 15
    %v56 = vsub.s32 0, %v55
    %v57 = vsel %vm51, %v56, %v55
    %vm58 = vcmp.ne.s32.totalorder %v36, 0
    %vm59 = vcmp.ne.s32.totalorder %v43, 0
    %vm60 = vcmp.ne.s32.totalorder %v50, 0
    %vm61 = vcmp.ne.s32.totalorder %v57, 0
    %vm62 = vcmp.lt.s32.totalorder %v36, 0
    %vm63 = vcmp.lt.s32.totalorder %v43, 0
    %vm64 = vcmp.lt.s32.totalorder %v50, 0
    %vm65 = vcmp.lt.s32.totalorder %v57, 0
    %vm66 = vmand %vm62, %vm58
    %vm67 = vmand %vm63, %vm59
    %vm68 = vmand %vm64, %vm60
    %vm69 = vmand %vm65, %vm61
    %v70 = vadd.s32 %v36, 16
    %v71 = vadd.s32 %v43, 16
    %v72 = vadd.s32 %v50, 16
    %v73 = vadd.s32 %v57, 16
    %v74 = vsel %vm66, %v70, %v36
    %v75 = vsel %vm67, %v71, %v43
    %v76 = vsel %vm68, %v72, %v50
    %v77 = vsel %vm69, %v73, %v57
    %vm78 = vcmp.eq.s32.totalorder %v74, 0
    %vm79 = vcmp.eq.s32.totalorder %v75, 0
    %vm80 = vcmp.eq.s32.totalorder %v76, 0
    %vm81 = vcmp.eq.s32.totalorder %v77, 0
    %vm82 = vcmp.eq.s32.totalorder %v74, 15
    %vm83 = vcmp.eq.s32.totalorder %v75, 15
    %vm84 = vcmp.eq.s32.totalorder %v76, 15
    %vm85 = vcmp.eq.s32.totalorder %v77, 15
    %v86 = vmax.f32 %v21, 0.0
    %v87 = vmax.f32 %v22, 0.0
    %v88 = vmax.f32 %v23, 0.0
    %v89 = vmax.f32 %v24, 0.0
    %v90 = vrot.slane %v86, 7
    %v91 = vrot.slane %v87, 7
    %v92 = vrot.slane %v88, 7
    %v93 = vrot.slane %v89, 7
    %vm94 = vcmp.lt.s32.totalorder %v26, 1
    %v95 = vsel %vm94, %v92, %v93
    %v96 = vsel %vm94, %v91, %v92
    %v97 = vsel %vm94, %v90, %v91
    %v98 = vsel %vm94, %v93, %v90
    %v99 = vsel %vm78, 0.0, %v98
    %v100 = vsel %vm79, 0.0, %v97
    %v101 = vsel %vm80, 0.0, %v96
    %v102 = vsel %vm81, 0.0, %v95
    %v103 = vrot.slane %v86, 1
    %v104 = vrot.slane %v87, 1
    %v105 = vrot.slane %v88, 1
    %v106 = vrot.slane %v89, 1
    %vm107 = vcmp.lt.s32.totalorder %v26, 7
    %v108 = vsel %vm107, %v105, %v106
    %v109 = vsel %vm107, %v104, %v105
    %v110 = vsel %vm107, %v103, %v104
    %v111 = vsel %vm107, %v106, %v103
    %v112 = vsel %vm82, 0.0, %v110
    %v113 = vsel %vm83, 0.0, %v109
    %v114 = vsel %vm84, 0.0, %v108
    %v115 = vsel %vm85, 0.0, %v111
    %120 = vrot.lane.b32.xlu0 %v86, 32
    %v121 = vpop.permute.xlu0 %120
    %122 = vrot.lane.b32.xlu0 %v87, 32
    %v123 = vpop.permute.xlu0 %122
    %124 = vrot.lane.b32.xlu0 %v88, 32
    %v125 = vpop.permute.xlu0 %124
    %126 = vrot.lane.b32.xlu0 %v89, 32
    %v127 = vpop.permute.xlu0 %126
    %136 = vrot.lane.b32.xlu0 %v112, 64
    %v137 = vpop.permute.xlu0 %136
    %138 = vrot.lane.b32.xlu0 %v113, 64
    %v139 = vpop.permute.xlu0 %138
    %140 = vrot.lane.b32.xlu0 %v114, 64
    %v141 = vpop.permute.xlu0 %140
    %142 = vrot.lane.b32.xlu0 %v115, 64
    %v143 = vpop.permute.xlu0 %142
    %vm148 = vcmask 261120
    %v149 = vsel %vm148, %v99, %v121
    %v150 = vsel %vm148, %v100, %v123
    %v151 = vsel %vm148, %v101, %v125
    %v152 = vsel %vm148, %v102, %v127
    %vm153 = vcmask 523264
    %v154 = vsel %vm153, %v149, %v137
    %v155 = vsel %vm153, %v150, %v139
    %v156 = vsel %vm153, %v151, %v141
    %v157 = vsel %vm153, %v152, %v143
    %v158 = vld [vmem:[%s1] sm:$0xff]
    %v159 = vld [vmem:[%s1 + $0x8] sm:$0xff]
    %v160 = vld [vmem:[%s1 + $0x10] sm:$0xff]
    %v161 = vld [vmem:[%s1 + $0x18] sm:$0xff]
    %v162 = vld [vmem:[%s1 + $0x20] sm:$0xff]
    %v163 = vld [vmem:[%s1 + $0x28] sm:$0xff]
    %v164 = vld [vmem:[%s1 + $0x30] sm:$0xff]
    %v165 = vld [vmem:[%s1 + $0x38] sm:$0xff]
    %v166 = vld [vmem:[%s1 + $0x40] sm:$0xff]
    %v167 = vld [vmem:[%s1 + $0x48] sm:$0xff]
    %v168 = vld [vmem:[%s1 + $0x50] sm:$0xff]
    %v169 = vld [vmem:[%s1 + $0x58] sm:$0xff]
    %v170 = vld [vmem:[%s2] sm:$0x1]
    %v172 = vlaneseq
    %v173 = vshrl.u32 %v172, 7
    %v174 = vsub.s32 0, %v173
    %v175 = vrot.slane %v170, %v174
    %vm177 = vcmask 785408
    %v179 = vsel %vm177, %v154, 0
    %v182 = vsel %vm177, %v155, 0
    %v185 = vsel %vm177, %v156, 0
    %v188 = vsel %vm177, %v157, 0
    %190 = vmatprep.subr.mxu0 0.0
    %191 = vmatpush1.msra.mxu0 %v158
    %192 = vmatprep.subr.mxu0 0.0
    %193 = vmatpush1.msra.mxu0 %v159
    %194 = vmatprep.subr.mxu0 0.0
    %195 = vmatpush1.msra.mxu0 %v160
    %196 = vmatprep.subr.mxu0 0.0
    %197 = vmatpush1.msra.mxu0 %v161
    %198 = vmatprep.subr.mxu0 0.0
    %199 = vmatpush1.msra.mxu0 %v162
    %200 = vmatprep.subr.mxu0 0.0
    %201 = vmatpush1.msra.mxu0 %v163
    %202 = vmatprep.subr.mxu0 0.0
    %203 = vmatpush1.msra.mxu0 %v164
    %204 = vmatprep.subr.mxu0 0.0
    %205 = vmatpush1.msra.mxu0 %v165
    %206 = vmatprep.subr.mxu0 0.0
    %207 = vmatpush1.msra.mxu0 %v166
    %208 = vmatprep.subr.mxu0 0.0
    %209 = vmatpush1.msra.mxu0 %v167
    %210 = vmatprep.subr.mxu0 0.0
    %211 = vmatpush1.msra.mxu0 %v168
    %212 = vmatprep.subr.mxu0 0.0
    %213 = vmatpush1.msra.mxu0 %v169
    %214 = vmatprep.subr.mxu0 0.0
    %215 = vmatpush1.msra.mxu0 0.0
    %216 = vmatprep.subr.mxu0 0.0
    %217 = vmatpush1.msra.mxu0 0.0
    %218 = vmatprep.subr.mxu0 0.0
    %219 = vmatpush1.msra.mxu0 0.0
    %220 = vmatprep.subr.mxu0 0.0
    %221 = vmatpush1.msra.mxu0 0.0
    %222 = vmatprep.subr.mxu0 0.0
    %223 = vmatpush1.msra.mxu0 0.0
    %224 = vmatprep.subr.mxu0 0.0
    %225 = vmatpush1.msra.mxu0 0.0
    %226 = vmatprep.subr.mxu0 0.0
    %227 = vmatpush1.msra.mxu0 0.0
    %228 = vmatprep.subr.mxu0 0.0
    %229 = vmatpush1.msra.mxu0 0.0
    %230 = vmatprep.subr.mxu0 0.0
    %231 = vmatpush1.msra.mxu0 0.0
    %232 = vmatprep.subr.mxu0 0.0
    %233 = vmatpush1.msra.mxu0 0.0
    %234 = vmatprep.subr.mxu0 0.0
    %235 = vmatpush1.msra.mxu0 0.0
    %236 = vmatprep.subr.mxu0 0.0
    %237 = vmatpush1.msra.mxu0 0.0
    %238 = vmatprep.subr.mxu0 0.0
    %239 = vmatpush1.msra.mxu0 0.0
    %240 = vmatprep.subr.mxu0 0.0
    %241 = vmatpush1.msra.mxu0 0.0
    %242 = vmatprep.subr.mxu0 0.0
    %243 = vmatpush1.msra.mxu0 0.0
    %244 = vmatprep.subr.mxu0 0.0
    %245 = vmatpush1.msra.mxu0 0.0
    %246 = vmatprep.subr.mxu0 0.0
    %247 = vmatpush1.msra.mxu0 0.0
    %248 = vmatprep.subr.mxu0 0.0
    %249 = vmatpush1.msra.mxu0 0.0
    %250 = vmatprep.subr.mxu0 0.0
    %251 = vmatpush1.msra.mxu0 0.0
    %252 = vmatprep.subr.mxu0 0.0
    %253 = vmatpush1.msra.mxu0 0.0
    %254 = vmatprep.mubr.f32.mxu0 0.0
    %255 = vmatmul.mubr.f32.gmra.mrb[0].mxu0 %v179
    %v256 = vpop.f32.mrb[0].mxu0
    %v257 = vadd.f32 %v175, %v256
    %v258 = vpop.f32.mrb[0].mxu0
    %259 = vmatprep.mubr.f32.mxu0 0.0
    %260 = vmatmul.mubr.f32.gmra.mrb[0].mxu0 %v182
    %v261 = vpop.f32.mrb[0].mxu0
    %v262 = vadd.f32 %v175, %v261
    %v263 = vpop.f32.mrb[0].mxu0
    %264 = vmatprep.mubr.f32.mxu0 0.0
    %265 = vmatmul.mubr.f32.gmra.mrb[0].mxu0 %v185
    %v266 = vpop.f32.mrb[0].mxu0
    %v267 = vadd.f32 %v175, %v266
    %v268 = vpop.f32.mrb[0].mxu0
    %269 = vmatprep.mubr.f32.mxu0 0.0
    %270 = vmatmul.mubr.f32.gmra.mrb[0].mxu0 %v188
    %v271 = vpop.f32.mrb[0].mxu0
    %v272 = vadd.f32 %v175, %v271
    %v273 = vpop.f32.mrb[0].mxu0
    %274 = vdwg.mxu0
    %v275 = vmax.f32 %v257, 0.0
    %v276 = vmax.f32 %v262, 0.0
    %v277 = vmax.f32 %v267, 0.0
    %v278 = vmax.f32 %v272, 0.0
    %v279 = vrot.slane %v275, 7
    %v280 = vrot.slane %v276, 7
    %v281 = vrot.slane %v277, 7
    %v282 = vrot.slane %v278, 7
    %v283 = vsel %vm94, %v281, %v282
    %v284 = vsel %vm94, %v280, %v281
    %v285 = vsel %vm94, %v279, %v280
    %v286 = vsel %vm94, %v282, %v279
    %v287 = vsel %vm78, 0.0, %v286
    %v288 = vsel %vm79, 0.0, %v285
    %v289 = vsel %vm80, 0.0, %v284
    %v290 = vsel %vm81, 0.0, %v283
    %v291 = vrot.slane %v275, 1
    %v292 = vrot.slane %v276, 1
    %v293 = vrot.slane %v277, 1
    %v294 = vrot.slane %v278, 1
    %v295 = vsel %vm107, %v293, %v294
    %v296 = vsel %vm107, %v292, %v293
    %v297 = vsel %vm107, %v291, %v292
    %v298 = vsel %vm107, %v294, %v291
    %v299 = vsel %vm82, 0.0, %v297
    %v300 = vsel %vm83, 0.0, %v296
    %v301 = vsel %vm84, 0.0, %v295
    %v302 = vsel %vm85, 0.0, %v298
    %307 = vrot.lane.b32.xlu0 %v275, 32
    %v308 = vpop.permute.xlu0 %307
    %309 = vrot.lane.b32.xlu0 %v276, 32
    %v310 = vpop.permute.xlu0 %309
    %311 = vrot.lane.b32.xlu0 %v277, 32
    %v312 = vpop.permute.xlu0 %311
    %313 = vrot.lane.b32.xlu0 %v278, 32
    %v314 = vpop.permute.xlu0 %313
    %323 = vrot.lane.b32.xlu0 %v299, 64
    %v324 = vpop.permute.xlu0 %323
    %325 = vrot.lane.b32.xlu0 %v300, 64
    %v326 = vpop.permute.xlu0 %325
    %327 = vrot.lane.b32.xlu0 %v301, 64
    %v328 = vpop.permute.xlu0 %327
    %329 = vrot.lane.b32.xlu0 %v302, 64
    %v330 = vpop.permute.xlu0 %329
    %v335 = vsel %vm148, %v287, %v308
    %v336 = vsel %vm148, %v288, %v310
    %v337 = vsel %vm148, %v289, %v312
    %v338 = vsel %vm148, %v290, %v314
    %v339 = vsel %vm153, %v335, %v324
    %v340 = vsel %vm153, %v336, %v326
    %v341 = vsel %vm153, %v337, %v328
    %v342 = vsel %vm153, %v338, %v330
    %v343 = vld [vmem:[%s3] sm:$0xff]
    %v344 = vld [vmem:[%s3 + $0x8] sm:$0xff]
    %v345 = vld [vmem:[%s3 + $0x10] sm:$0xff]
    %v346 = vld [vmem:[%s3 + $0x18] sm:$0xff]
    %v347 = vld [vmem:[%s3 + $0x20] sm:$0xff]
    %v348 = vld [vmem:[%s3 + $0x28] sm:$0xff]
    %v349 = vld [vmem:[%s3 + $0x30] sm:$0xff]
    %v350 = vld [vmem:[%s3 + $0x38] sm:$0xff]
    %v351 = vld [vmem:[%s3 + $0x40] sm:$0xff]
    %v352 = vld [vmem:[%s3 + $0x48] sm:$0xff]
    %v353 = vld [vmem:[%s3 + $0x50] sm:$0xff]
    %v354 = vld [vmem:[%s3 + $0x58] sm:$0xff]
    %v355 = vld [vmem:[%s4] sm:$0x1]
    %v357 = vlaneseq
    %v358 = vshrl.u32 %v357, 7
    %v359 = vsub.s32 0, %v358
    %v360 = vrot.slane %v355, %v359
    %v363 = vsel %vm177, %v339, 0
    %v366 = vsel %vm177, %v340, 0
    %v369 = vsel %vm177, %v341, 0
    %v372 = vsel %vm177, %v342, 0
    %374 = vmatprep.subr.mxu0 0.0
    %375 = vmatpush1.msra.mxu0 %v343
    %376 = vmatprep.subr.mxu0 0.0
    %377 = vmatpush1.msra.mxu0 %v344
    %378 = vmatprep.subr.mxu0 0.0
    %379 = vmatpush1.msra.mxu0 %v345
    %380 = vmatprep.subr.mxu0 0.0
    %381 = vmatpush1.msra.mxu0 %v346
    %382 = vmatprep.subr.mxu0 0.0
    %383 = vmatpush1.msra.mxu0 %v347
    %384 = vmatprep.subr.mxu0 0.0
    %385 = vmatpush1.msra.mxu0 %v348
    %386 = vmatprep.subr.mxu0 0.0
    %387 = vmatpush1.msra.mxu0 %v349
    %388 = vmatprep.subr.mxu0 0.0
    %389 = vmatpush1.msra.mxu0 %v350
    %390 = vmatprep.subr.mxu0 0.0
    %391 = vmatpush1.msra.mxu0 %v351
    %392 = vmatprep.subr.mxu0 0.0
    %393 = vmatpush1.msra.mxu0 %v352
    %394 = vmatprep.subr.mxu0 0.0
    %395 = vmatpush1.msra.mxu0 %v353
    %396 = vmatprep.subr.mxu0 0.0
    %397 = vmatpush1.msra.mxu0 %v354
    %398 = vmatprep.subr.mxu0 0.0
    %399 = vmatpush1.msra.mxu0 0.0
    %400 = vmatprep.subr.mxu0 0.0
    %401 = vmatpush1.msra.mxu0 0.0
    %402 = vmatprep.subr.mxu0 0.0
    %403 = vmatpush1.msra.mxu0 0.0
    %404 = vmatprep.subr.mxu0 0.0
    %405 = vmatpush1.msra.mxu0 0.0
    %406 = vmatprep.subr.mxu0 0.0
    %407 = vmatpush1.msra.mxu0 0.0
    %408 = vmatprep.subr.mxu0 0.0
    %409 = vmatpush1.msra.mxu0 0.0
    %410 = vmatprep.subr.mxu0 0.0
    %411 = vmatpush1.msra.mxu0 0.0
    %412 = vmatprep.subr.mxu0 0.0
    %413 = vmatpush1.msra.mxu0 0.0
    %414 = vmatprep.subr.mxu0 0.0
    %415 = vmatpush1.msra.mxu0 0.0
    %416 = vmatprep.subr.mxu0 0.0
    %417 = vmatpush1.msra.mxu0 0.0
    %418 = vmatprep.subr.mxu0 0.0
    %419 = vmatpush1.msra.mxu0 0.0
    %420 = vmatprep.subr.mxu0 0.0
    %421 = vmatpush1.msra.mxu0 0.0
    %422 = vmatprep.subr.mxu0 0.0
    %423 = vmatpush1.msra.mxu0 0.0
    %424 = vmatprep.subr.mxu0 0.0
    %425 = vmatpush1.msra.mxu0 0.0
    %426 = vmatprep.subr.mxu0 0.0
    %427 = vmatpush1.msra.mxu0 0.0
    %428 = vmatprep.subr.mxu0 0.0
    %429 = vmatpush1.msra.mxu0 0.0
    %430 = vmatprep.subr.mxu0 0.0
    %431 = vmatpush1.msra.mxu0 0.0
    %432 = vmatprep.subr.mxu0 0.0
    %433 = vmatpush1.msra.mxu0 0.0
    %434 = vmatprep.subr.mxu0 0.0
    %435 = vmatpush1.msra.mxu0 0.0
    %436 = vmatprep.subr.mxu0 0.0
    %437 = vmatpush1.msra.mxu0 0.0
    %438 = vmatprep.mubr.f32.mxu0 0.0
    %439 = vmatmul.mubr.f32.gmra.mrb[0].mxu0 %v363
    %v440 = vpop.f32.mrb[0].mxu0
    %v441 = vadd.f32 %v360, %v440
    %v442 = vpop.f32.mrb[0].mxu0
    %443 = vmatprep.mubr.f32.mxu0 0.0
    %444 = vmatmul.mubr.f32.gmra.mrb[0].mxu0 %v366
    %v445 = vpop.f32.mrb[0].mxu0
    %v446 = vadd.f32 %v360, %v445
    %v447 = vpop.f32.mrb[0].mxu0
    %448 = vmatprep.mubr.f32.mxu0 0.0
    %449 = vmatmul.mubr.f32.gmra.mrb[0].mxu0 %v369
    %v450 = vpop.f32.mrb[0].mxu0
    %v451 = vadd.f32 %v360, %v450
    %v452 = vpop.f32.mrb[0].mxu0
    %453 = vmatprep.mubr.f32.mxu0 0.0
    %454 = vmatmul.mubr.f32.gmra.mrb[0].mxu0 %v372
    %v455 = vpop.f32.mrb[0].mxu0
    %v456 = vadd.f32 %v360, %v455
    %v457 = vpop.f32.mrb[0].mxu0
    %458 = vdwg.mxu0
    %v459 = vmul.f32 %v441, 0.3
    %v460 = vmul.f32 %v446, 0.3
    %v461 = vmul.f32 %v451, 0.3
    %v462 = vmul.f32 %v456, 0.3
    %v463 = vadd.f32 %v21, %v459
    %v464 = vadd.f32 %v22, %v460
    %v465 = vadd.f32 %v23, %v461
    %v466 = vadd.f32 %v24, %v462
    %467 = vst.msk [vmem:[#allocation2] sm:$0xff] %vm148, %v463
    %468 = vst.msk [vmem:[#allocation2 + $0x8] sm:$0xff] %vm148, %v464
    %469 = vst.msk [vmem:[#allocation2 + $0x10] sm:$0xff] %vm148, %v465
    %470 = vst.msk [vmem:[#allocation2 + $0x18] sm:$0xff] %vm148, %v466
    // Predicated region
    $region22: #{tpu_custom_call.1} parent=1 // pred_check
      _
    $region23: #{tpu_custom_call.1} parent=1 // pred_check_branch
      %472 = sbr.rel (0) target = $region25
    $region24: #{tpu_custom_call.1} parent=1 // pred_region
      %s474 = ssub.s32 512, 512
      %475 = vsyncadd [#allocation3], %s474
      %s476 = sshll.u32 [#allocation2], 4
      %s477 = int_to_ptr.vmem [resolvable:$true] %s476
      %482 = dma.vmem_to_hbm [thread:$0]  %s477, 512, %s5, [#allocation3], 128, 128, 8
    $region25: #{tpu_custom_call.1} parent=1 // pred_fallthru
      _
    // Predicated region
    $region26: #{tpu_custom_call.1} parent=1 // pred_check
      _
    $region27: #{tpu_custom_call.1} parent=1 // pred_check_branch
      %484 = sbr.rel (0) target = $region29
    $region28: #{tpu_custom_call.1} parent=1 // pred_region
      %485 = dma.done [#allocation3], 512
    $region29: #{tpu_custom_call.1} parent=1 // pred_fallthru
      _
    %486 = vsyncpa [#allocation3], 1

</llo_original>
